<compile_context>
chip_gen: v7x
topology: tpu7x:2x2x1
jax: 0.10.0
libtpu: 0.0.40
codegen_flags: <defaults>
</compile_context>

<pallas_src>
import functools

import jax
import jax.numpy as jnp
from jax.experimental import pallas as pl
from jax.experimental.pallas import tpu as pltpu


def _round_up(x, m):
    return (x + m - 1) // m * m


def _make_time_embed_kernel(B, s_in, s_out, s_in_p, s_out_p, channels):
    """Builds the fused kernel for static (B, s_in, s_out, padded seqs, C)."""
    C = channels
    C3 = 3 * C
    Mx = B * s_in_p  # 8-aligned split point between the x and y rows

    def kernel(xy_ref, w1_ref, w2_ref, wmx_ref, wmy_ref, bias_ref, o_ref):
        # Packed biases: row 0 = b1, row 1 = b2, row 2 = bm_x, row 3 = bm_y.
        bias = bias_ref[...]
        b1, b2 = bias[0:1, :C3], bias[1:2, :C]
        bmx, bmy = bias[2:3, :s_in], bias[3:4, :s_out]

        # ---- shared projections over the concatenated (x | y) rows ---------
        xy = xy_ref[...]                                              # (M, D)
        h1 = jnp.dot(xy, w1_ref[...], preferred_element_type=jnp.float32)
        h1 = jnp.maximum(h1 + b1, 0.0)                                # (M, 3C)
        h2 = jnp.dot(h1, w2_ref[...],
                     preferred_element_type=jnp.float32) + b2         # (M, C)

        # ---- shared Indepent_Linear along the sequence axis -----------------
        def indep(h2_part, seq_p, wm, bm):
            # (B*seq_p, C) -> (B*C, seq_p); the transpose runs on the XLU,
            # leaving one clean MXU matmul per branch.
            h = h2_part.reshape(B, seq_p, C).transpose(0, 2, 1)
            h = h.reshape(B * C, seq_p)
            return jnp.dot(h, wm, preferred_element_type=jnp.float32) + bm

        ox = indep(h2[:Mx], s_in_p, wmx_ref[...], bmx)      # (B*C, s_in)
        oy = indep(h2[Mx:], s_out_p, wmy_ref[...], bmy)     # (B*C, s_out)

        # One output slab, one full-block store.
        o_ref[...] = jnp.concatenate([ox, oy], axis=-1).astype(o_ref.dtype)

    return kernel


def _full_spec(shape):
    # full-array block (satisfies the (8,128) rule since block == array dims)
    return pl.BlockSpec(shape, lambda i: (0,) * len(shape))


def _time_embedding_pallas(xy, w1, w2, wm_x, wm_y, bias, *,
                           B, s_in, s_out, s_in_p, s_out_p, channels):
    M, D = xy.shape
    C = channels
    C3 = 3 * C

    kernel = _make_time_embed_kernel(B, s_in, s_out, s_in_p, s_out_p, C)

    flops = (2 * M * D * C3 + 2 * M * C3 * C
             + 2 * B * C * (s_in_p * s_in + s_out_p * s_out))
    itemsize = jnp.dtype(xy.dtype).itemsize
    bytes_accessed = itemsize * (xy.size + w1.size + w2.size + wm_x.size
                                 + wm_y.size + bias.size
                                 + B * C * (s_in + s_out))

    out = pl.pallas_call(
        kernel,
        out_shape=jax.ShapeDtypeStruct((B * C, s_in + s_out), xy.dtype),
        grid_spec=pltpu.PrefetchScalarGridSpec(
            num_scalar_prefetch=0,
            grid=(1,),
            in_specs=[
                _full_spec(xy.shape),
                _full_spec(w1.shape),
                _full_spec(w2.shape),
                _full_spec(wm_x.shape),
                _full_spec(wm_y.shape),
                _full_spec(bias.shape),
            ],
            out_specs=_full_spec((B * C, s_in + s_out)),
        ),
        compiler_params=pltpu.CompilerParams(
            dimension_semantics=("arbitrary",)),
        cost_estimate=pl.CostEstimate(
            flops=flops, transcendentals=0, bytes_accessed=bytes_accessed),
    )(xy, w1, w2, wm_x, wm_y, bias)
    return out


@functools.partial(jax.jit, static_argnames=("channels", "compute_dtype"))
def time_embedding_forward(params, x_mark, y_mark, channels,
                           compute_dtype=jnp.float32):
    B, s_in, D = x_mark.shape
    _, s_out, _ = y_mark.shape
    C = channels
    cd = compute_dtype

    # Pad the sequence axes to multiples of 8 so the in-kernel x/y split and
    # per-batch reshapes land on (8,128) sublane-tile boundaries (free views).
    s_in_p, s_out_p = _round_up(s_in, 8), _round_up(s_out, 8)
    xp = jnp.pad(x_mark, ((0, 0), (0, s_in_p - s_in), (0, 0))).astype(cd)
    yp = jnp.pad(y_mark, ((0, 0), (0, s_out_p - s_out), (0, 0))).astype(cd)
    # Concatenate x & y rows in the wrapper (free XLA op) -> ONE kernel input.
    xy = jnp.concatenate([xp.reshape(B * s_in_p, D),
                          yp.reshape(B * s_out_p, D)], axis=0)      # (M, D)

    # Pad the shared Indepent_Linear weights' contraction axis to match; the
    # padded rows are zero so padded sequence positions contribute nothing.
    wm_x = jnp.pad(params["wm_x"], ((0, s_in_p - s_in), (0, 0))).astype(cd)
    wm_y = jnp.pad(params["wm_y"], ((0, s_out_p - s_out), (0, 0))).astype(cd)

    # Pack all four biases into a single (4, W) buffer -> one DMA instead of 4.
    C3 = 3 * C
    W = max(C3, C, s_in, s_out)

    def _row(v):
        return jnp.pad(v, ((0, 0), (0, W - v.shape[1])))

    bias = jnp.concatenate([_row(params["b1"]), _row(params["b2"]),
                            _row(params["bm_x"]), _row(params["bm_y"])],
                           axis=0).astype(cd)

    o = _time_embedding_pallas(
        xy, params["w1"].astype(cd), params["w2"].astype(cd), wm_x, wm_y, bias,
        B=B, s_in=s_in, s_out=s_out, s_in_p=s_in_p, s_out_p=s_out_p,
        channels=C)

    # (B*C, s_in + s_out) slab -> (B, C, 1, S) pair, matching PyTorch's
    # `.unsqueeze(2).transpose(1, 3)` followed by the shared Indepent_Linear.
    x_t = o[:, :s_in].reshape(B, C, 1, s_in)
    y_t = o[:, s_in:].reshape(B, C, 1, s_out)
    return x_t, y_t


def _xavier_uniform(key, shape, fan_in, fan_out, dtype=jnp.float32):
    bound = jnp.sqrt(6.0 / (fan_in + fan_out))
    return jax.random.uniform(key, shape, dtype, minval=-bound, maxval=bound)


def init_time_embedding_params(key, s_in, s_out, c_date, channels):
    ks = jax.random.split(key, 10)
    c3 = channels * 3
    params = {
        # time_proj1: Linear(c_date -> 3C)   (stored as (in, out))
        "w1": _xavier_uniform(ks[0], (c_date, c3), c_date, c3),
        "b1": _xavier_uniform(ks[1], (1, c3), 1, c3),
        # time_proj2: Linear(3C -> C)
        "w2": _xavier_uniform(ks[2], (c3, channels), c3, channels),
        "b2": _xavier_uniform(ks[3], (1, channels), 1, channels),
        # mlp_x: shared Indepent_Linear(s_in -> s_in)
        "wm_x": _xavier_uniform(ks[4], (s_in, s_in), s_in, s_in),
        "bm_x": _xavier_uniform(ks[5], (1, s_in), 1, s_in),
        # mlp_y: shared Indepent_Linear(s_out -> s_out)
        "wm_y": _xavier_uniform(ks[6], (s_out, s_out), s_out, s_out),
        "bm_y": _xavier_uniform(ks[7], (1, s_out), 1, s_out),
        # time_proj3 is defined in __init__ but unused in forward -> omitted.
    }
    return params


def _reference_branch(params, mark, wm, bm):
    h1 = jnp.maximum(mark @ params["w1"] + params["b1"], 0.0)
    h2 = h1 @ params["w2"] + params["b2"]              # (B, S, C)
    h2t = jnp.transpose(h2, (0, 2, 1))                 # (B, C, S)
    out = jnp.einsum("bcs,so->bco", h2t, wm) + bm      # (B, C, S)
    return out[:, :, None, :]                          # (B, C, 1, S)


if __name__ == "__main__":
    B, s_in, s_out, c_date, channels = 2, 8, 16, 4, 4

    key = jax.random.PRNGKey(0)
    kp, kx, ky = jax.random.split(key, 3)
    params = init_time_embedding_params(kp, s_in, s_out, c_date, channels)

    x_mark = jax.random.normal(kx, (B, s_in, c_date), jnp.float32)
    y_mark = jax.random.normal(ky, (B, s_out, c_date), jnp.float32)

    x_t, y_t = time_embedding_forward(params, x_mark, y_mark, channels)
    jax.block_until_ready((x_t, y_t))

    assert x_t.shape == (B, channels, 1, s_in)
    assert y_t.shape == (B, channels, 1, s_out)

    x_ref = _reference_branch(params, x_mark, params["wm_x"], params["bm_x"])
    y_ref = _reference_branch(params, y_mark, params["wm_y"], params["bm_y"])
    assert jnp.allclose(x_t, x_ref, atol=1e-5, rtol=1e-5)
    assert jnp.allclose(y_t, y_ref, atol=1e-5, rtol=1e-5)

    print("KERNEL_OK")
</pallas_src>

<mosaic_0001>
module attributes {stable_mosaic.version = 11 : i64} {
  func.func @kernel(%arg0: i32, %arg1: memref<48x4xf32, #tpu.memory_space<vmem>>, %arg2: memref<4x12xf32, #tpu.memory_space<vmem>>, %arg3: memref<12x4xf32, #tpu.memory_space<vmem>>, %arg4: memref<8x8xf32, #tpu.memory_space<vmem>>, %arg5: memref<16x16xf32, #tpu.memory_space<vmem>>, %arg6: memref<4x16xf32, #tpu.memory_space<vmem>>, %arg7: memref<8x24xf32, #tpu.memory_space<vmem>>) attributes {dimension_semantics = [#tpu.dimension_semantics<arbitrary>], iteration_bounds = array<i64: 1>, scalar_prefetch = 0 : i64, scratch_operands = 0 : i64, tpu.core_type = #tpu.core_type<tc>, window_params = [{pipeline_mode = #tpu.pipeline_mode<synchronous>, transform_indices = @transform_0, window_bounds = array<i64: 48, 4>}, {pipeline_mode = #tpu.pipeline_mode<synchronous>, transform_indices = @transform_1, window_bounds = array<i64: 4, 12>}, {pipeline_mode = #tpu.pipeline_mode<synchronous>, transform_indices = @transform_2, window_bounds = array<i64: 12, 4>}, {pipeline_mode = #tpu.pipeline_mode<synchronous>, transform_indices = @transform_3, window_bounds = array<i64: 8, 8>}, {pipeline_mode = #tpu.pipeline_mode<synchronous>, transform_indices = @transform_4, window_bounds = array<i64: 16, 16>}, {pipeline_mode = #tpu.pipeline_mode<synchronous>, transform_indices = @transform_5, window_bounds = array<i64: 4, 16>}, {pipeline_mode = #tpu.pipeline_mode<synchronous>, transform_indices = @transform_6, window_bounds = array<i64: 8, 24>}]} {
    %c0 = arith.constant 0 : index
    %c0_0 = arith.constant 0 : index
    %0 = vector.load %arg6[%c0, %c0_0] : memref<4x16xf32, #tpu.memory_space<vmem>>, vector<4x16xf32>
    %1 = vector.extract_strided_slice %0 {offsets = [0, 0], sizes = [1, 12], strides = [1, 1]} : vector<4x16xf32> to vector<1x12xf32>
    %2 = vector.extract_strided_slice %0 {offsets = [1, 0], sizes = [1, 4], strides = [1, 1]} : vector<4x16xf32> to vector<1x4xf32>
    %3 = vector.extract_strided_slice %0 {offsets = [2, 0], sizes = [1, 8], strides = [1, 1]} : vector<4x16xf32> to vector<1x8xf32>
    %4 = vector.extract_strided_slice %0 {offsets = [3, 0], sizes = [1, 16], strides = [1, 1]} : vector<4x16xf32> to vector<1x16xf32>
    %c0_1 = arith.constant 0 : index
    %c0_2 = arith.constant 0 : index
    %5 = vector.load %arg1[%c0_1, %c0_2] : memref<48x4xf32, #tpu.memory_space<vmem>>, vector<48x4xf32>
    %c0_3 = arith.constant 0 : index
    %c0_4 = arith.constant 0 : index
    %6 = vector.load %arg2[%c0_3, %c0_4] : memref<4x12xf32, #tpu.memory_space<vmem>>, vector<4x12xf32>
    %cst = arith.constant dense<0.000000e+00> : vector<48x12xf32>
    %7 = tpu.matmul %5, %6, %cst {dimension_numbers = #tpu.dot_dimension_numbers<[1], [0], [0], [1], [0, 0, 1, 1], [], []>} : vector<48x4xf32>, vector<4x12xf32>, vector<48x12xf32> -> vector<48x12xf32>
    %8 = vector.broadcast %1 : vector<1x12xf32> to vector<48x12xf32>
    %9 = arith.addf %7, %8 : vector<48x12xf32>
    %cst_5 = arith.constant 0.000000e+00 : f32
    %10 = vector.broadcast %cst_5 : f32 to vector<48x12xf32>
    %11 = arith.maximumf %9, %10 : vector<48x12xf32>
    %c0_6 = arith.constant 0 : index
    %c0_7 = arith.constant 0 : index
    %12 = vector.load %arg3[%c0_6, %c0_7] : memref<12x4xf32, #tpu.memory_space<vmem>>, vector<12x4xf32>
    %cst_8 = arith.constant dense<0.000000e+00> : vector<48x4xf32>
    %13 = tpu.matmul %11, %12, %cst_8 {dimension_numbers = #tpu.dot_dimension_numbers<[1], [0], [0], [1], [0, 0, 1, 1], [], []>} : vector<48x12xf32>, vector<12x4xf32>, vector<48x4xf32> -> vector<48x4xf32>
    %14 = vector.broadcast %2 : vector<1x4xf32> to vector<48x4xf32>
    %15 = arith.addf %13, %14 : vector<48x4xf32>
    %16 = vector.extract_strided_slice %15 {offsets = [0, 0], sizes = [16, 4], strides = [1, 1]} : vector<48x4xf32> to vector<16x4xf32>
    %c0_9 = arith.constant 0 : index
    %c0_10 = arith.constant 0 : index
    %17 = vector.load %arg4[%c0_9, %c0_10] : memref<8x8xf32, #tpu.memory_space<vmem>>, vector<8x8xf32>
    %18 = vector.shape_cast %16 : vector<16x4xf32> to vector<2x8x4xf32>
    %19 = tpu.transpose %18, [0, 2, 1] : vector<2x8x4xf32> -> vector<2x4x8xf32>
    %20 = vector.shape_cast %19 : vector<2x4x8xf32> to vector<8x8xf32>
    %cst_11 = arith.constant dense<0.000000e+00> : vector<8x8xf32>
    %21 = tpu.matmul %20, %17, %cst_11 {dimension_numbers = #tpu.dot_dimension_numbers<[1], [0], [0], [1], [0, 0, 1, 1], [], []>} : vector<8x8xf32>, vector<8x8xf32>, vector<8x8xf32> -> vector<8x8xf32>
    %22 = vector.broadcast %3 : vector<1x8xf32> to vector<8x8xf32>
    %23 = arith.addf %21, %22 : vector<8x8xf32>
    %24 = vector.extract_strided_slice %15 {offsets = [16, 0], sizes = [32, 4], strides = [1, 1]} : vector<48x4xf32> to vector<32x4xf32>
    %c0_12 = arith.constant 0 : index
    %c0_13 = arith.constant 0 : index
    %25 = vector.load %arg5[%c0_12, %c0_13] : memref<16x16xf32, #tpu.memory_space<vmem>>, vector<16x16xf32>
    %26 = vector.shape_cast %24 : vector<32x4xf32> to vector<2x16x4xf32>
    %27 = tpu.transpose %26, [0, 2, 1] : vector<2x16x4xf32> -> vector<2x4x16xf32>
    %28 = vector.shape_cast %27 : vector<2x4x16xf32> to vector<8x16xf32>
    %cst_14 = arith.constant dense<0.000000e+00> : vector<8x16xf32>
    %29 = tpu.matmul %28, %25, %cst_14 {dimension_numbers = #tpu.dot_dimension_numbers<[1], [0], [0], [1], [0, 0, 1, 1], [], []>} : vector<8x16xf32>, vector<16x16xf32>, vector<8x16xf32> -> vector<8x16xf32>
    %30 = vector.broadcast %4 : vector<1x16xf32> to vector<8x16xf32>
    %31 = arith.addf %29, %30 : vector<8x16xf32>
    %32 = tpu.concatenate %23, %31 in 1 : vector<8x8xf32>, vector<8x16xf32> -> vector<8x24xf32>
    %c0_15 = arith.constant 0 : index
    %c0_16 = arith.constant 0 : index
    %33 = vector.load %arg7[%c0_15, %c0_16] : memref<8x24xf32, #tpu.memory_space<vmem>>, vector<8x24xf32>
    tpu.vector_store %arg7[%c0_15, %c0_16], %32 {strides = array<i32>} : memref<8x24xf32, #tpu.memory_space<vmem>>, vector<8x24xf32>,
    return
  }
  func.func @transform_0(%arg0: i32) -> (i32, i32) {
    %c0_i32 = arith.constant 0 : i32
    %c0_i32_0 = arith.constant 0 : i32
    %c0_i32_1 = arith.constant 0 : i32
    return %c0_i32, %c0_i32_0 : i32, i32
  }
  func.func @transform_1(%arg0: i32) -> (i32, i32) {
    %c0_i32 = arith.constant 0 : i32
    %c0_i32_0 = arith.constant 0 : i32
    %c0_i32_1 = arith.constant 0 : i32
    return %c0_i32, %c0_i32_0 : i32, i32
  }
  func.func @transform_2(%arg0: i32) -> (i32, i32) {
    %c0_i32 = arith.constant 0 : i32
    %c0_i32_0 = arith.constant 0 : i32
    %c0_i32_1 = arith.constant 0 : i32
    return %c0_i32, %c0_i32_0 : i32, i32
  }
  func.func @transform_3(%arg0: i32) -> (i32, i32) {
    %c0_i32 = arith.constant 0 : i32
    %c0_i32_0 = arith.constant 0 : i32
    %c0_i32_1 = arith.constant 0 : i32
    return %c0_i32, %c0_i32_0 : i32, i32
  }
  func.func @transform_4(%arg0: i32) -> (i32, i32) {
    %c0_i32 = arith.constant 0 : i32
    %c0_i32_0 = arith.constant 0 : i32
    %c0_i32_1 = arith.constant 0 : i32
    return %c0_i32, %c0_i32_0 : i32, i32
  }
  func.func @transform_5(%arg0: i32) -> (i32, i32) {
    %c0_i32 = arith.constant 0 : i32
    %c0_i32_0 = arith.constant 0 : i32
    %c0_i32_1 = arith.constant 0 : i32
    return %c0_i32, %c0_i32_0 : i32, i32
  }
  func.func @transform_6(%arg0: i32) -> (i32, i32) {
    %c0_i32 = arith.constant 0 : i32
    %c0_i32_0 = arith.constant 0 : i32
    %c0_i32_1 = arith.constant 0 : i32
    return %c0_i32, %c0_i32_0 : i32, i32
  }
}

</mosaic_0001>

<llo_original>
// kernel: time_embedding_forward.1
$region0: #{time_embedding_forward.1}
  #allocation0 [shape = 'u32[]', space=smem, size = 0x4, offset = 0x4, fixed_abs, tag = 'smem constant byte address 0x4 - core index']
  #allocation1 [shape = 'u32[144,128]{1,0:T(1,128)}', space=vmem, size = 0x12000, scoped, tag = 'internal scratch']
  %s0 = inlined_call_operand.vmem [shape: f32[48,4], index: 0, kind: input, shape index: {}]
  %s1 = inlined_call_operand.vmem [shape: f32[4,12], index: 1, kind: input, shape index: {}]
  %s2 = inlined_call_operand.vmem [shape: f32[12,4], index: 2, kind: input, shape index: {}]
  %s3 = inlined_call_operand.vmem [shape: f32[8,8], index: 3, kind: input, shape index: {}]
  %s4 = inlined_call_operand.vmem [shape: f32[16,16], index: 4, kind: input, shape index: {}]
  %s5 = inlined_call_operand.vmem [shape: f32[4,16], index: 5, kind: input, shape index: {}]
  %s6 = inlined_call_operand.vmem [shape: f32[8,24], index: 6, kind: output, shape index: {}]
  %s7 = sld [smem:[#allocation0]]
  $region34: #{time_embedding_forward.1} parent=0
    _
  %s9 = ssub.s32 1, %s7
  %s10 = scalar_select 0, %s9, %s7
  // Predicated region
  $region2: #{time_embedding_forward.1} parent=0 // pred_check
    _
  $region3: #{time_embedding_forward.1} parent=0 // pred_check_branch
    %12 = sbr.rel (0) target = $region5
  $region4: #{time_embedding_forward.1} parent=0 // pred_region
    _
  $region5: #{time_embedding_forward.1} parent=0 // pred_fallthru
    _
  // Predicated region
  $region6: #{time_embedding_forward.1} parent=0 // pred_check
    _
  $region7: #{time_embedding_forward.1} parent=0 // pred_check_branch
    %14 = sbr.rel (0) target = $region9
  $region8: #{time_embedding_forward.1} parent=0 // pred_region
    _
  $region9: #{time_embedding_forward.1} parent=0 // pred_fallthru
    _
  // Predicated region
  $region10: #{time_embedding_forward.1} parent=0 // pred_check
    _
  $region11: #{time_embedding_forward.1} parent=0 // pred_check_branch
    %16 = sbr.rel (0) target = $region13
  $region12: #{time_embedding_forward.1} parent=0 // pred_region
    _
  $region13: #{time_embedding_forward.1} parent=0 // pred_fallthru
    _
  // Predicated region
  $region14: #{time_embedding_forward.1} parent=0 // pred_check
    _
  $region15: #{time_embedding_forward.1} parent=0 // pred_check_branch
    %18 = sbr.rel (0) target = $region17
  $region16: #{time_embedding_forward.1} parent=0 // pred_region
    _
  $region17: #{time_embedding_forward.1} parent=0 // pred_fallthru
    _
  // Predicated region
  $region18: #{time_embedding_forward.1} parent=0 // pred_check
    _
  $region19: #{time_embedding_forward.1} parent=0 // pred_check_branch
    %20 = sbr.rel (0) target = $region21
  $region20: #{time_embedding_forward.1} parent=0 // pred_region
    _
  $region21: #{time_embedding_forward.1} parent=0 // pred_fallthru
    _
  // Predicated region
  $region22: #{time_embedding_forward.1} parent=0 // pred_check
    _
  $region23: #{time_embedding_forward.1} parent=0 // pred_check_branch
    %22 = sbr.rel (0) target = $region25
  $region24: #{time_embedding_forward.1} parent=0 // pred_region
    _
  $region25: #{time_embedding_forward.1} parent=0 // pred_fallthru
    _
  %v23 = vld [vmem:[%s5] sm:$0xf]
  %v24 = vld [vmem:[%s0] sm:$0xff]
  %v25 = vld [vmem:[%s0 + $0x8] sm:$0xff]
  %v26 = vld [vmem:[%s0 + $0x10] sm:$0xff]
  %v27 = vld [vmem:[%s0 + $0x18] sm:$0xff]
  %v28 = vld [vmem:[%s0 + $0x20] sm:$0xff]
  %v29 = vld [vmem:[%s0 + $0x28] sm:$0xff]
  %v30 = vld [vmem:[%s1] sm:$0xf]
  %v31 = vlaneseq
  %v32 = vshrl.u32 %v31, 7
  %v33 = vsub.s32 0, %v32
  %v34 = vrot.slane %v23, %v33
  %vm35 = vcmask 31744
  %v37 = vsel %vm35, %v24, 0
  %v40 = vsel %vm35, %v25, 0
  %v43 = vsel %vm35, %v26, 0
  %v46 = vsel %vm35, %v27, 0
  %v49 = vsel %vm35, %v28, 0
  %v52 = vsel %vm35, %v29, 0
  %vm54 = vcmask 1043456
  %v56 = vsel %vm54, %v30, 0
  %58 = vmatprep.subr.mxu0 0.0
  %59 = vmatpush1.msra.mxu0 %v56
  %60 = vmatprep.subr.mxu0 0.0
  %61 = vmatpush1.msra.mxu0 0.0
  %62 = vmatprep.subr.mxu0 0.0
  %63 = vmatpush1.msra.mxu0 0.0
  %64 = vmatprep.subr.mxu0 0.0
  %65 = vmatpush1.msra.mxu0 0.0
  %66 = vmatprep.subr.mxu0 0.0
  %67 = vmatpush1.msra.mxu0 0.0
  %68 = vmatprep.subr.mxu0 0.0
  %69 = vmatpush1.msra.mxu0 0.0
  %70 = vmatprep.subr.mxu0 0.0
  %71 = vmatpush1.msra.mxu0 0.0
  %72 = vmatprep.subr.mxu0 0.0
  %73 = vmatpush1.msra.mxu0 0.0
  %74 = vmatprep.subr.mxu0 0.0
  %75 = vmatpush1.msra.mxu0 0.0
  %76 = vmatprep.subr.mxu0 0.0
  %77 = vmatpush1.msra.mxu0 0.0
  %78 = vmatprep.subr.mxu0 0.0
  %79 = vmatpush1.msra.mxu0 0.0
  %80 = vmatprep.subr.mxu0 0.0
  %81 = vmatpush1.msra.mxu0 0.0
  %82 = vmatprep.subr.mxu0 0.0
  %83 = vmatpush1.msra.mxu0 0.0
  %84 = vmatprep.subr.mxu0 0.0
  %85 = vmatpush1.msra.mxu0 0.0
  %86 = vmatprep.subr.mxu0 0.0
  %87 = vmatpush1.msra.mxu0 0.0
  %88 = vmatprep.subr.mxu0 0.0
  %89 = vmatpush1.msra.mxu0 0.0
  %90 = vmatprep.subr.mxu0 0.0
  %91 = vmatpush1.msra.mxu0 0.0
  %92 = vmatprep.subr.mxu0 0.0
  %93 = vmatpush1.msra.mxu0 0.0
  %94 = vmatprep.subr.mxu0 0.0
  %95 = vmatpush1.msra.mxu0 0.0
  %96 = vmatprep.subr.mxu0 0.0
  %97 = vmatpush1.msra.mxu0 0.0
  %98 = vmatprep.subr.mxu0 0.0
  %99 = vmatpush1.msra.mxu0 0.0
  %100 = vmatprep.subr.mxu0 0.0
  %101 = vmatpush1.msra.mxu0 0.0
  %102 = vmatprep.subr.mxu0 0.0
  %103 = vmatpush1.msra.mxu0 0.0
  %104 = vmatprep.subr.mxu0 0.0
  %105 = vmatpush1.msra.mxu0 0.0
  %106 = vmatprep.subr.mxu0 0.0
  %107 = vmatpush1.msra.mxu0 0.0
  %108 = vmatprep.subr.mxu0 0.0
  %109 = vmatpush1.msra.mxu0 0.0
  %110 = vmatprep.subr.mxu0 0.0
  %111 = vmatpush1.msra.mxu0 0.0
  %112 = vmatprep.subr.mxu0 0.0
  %113 = vmatpush1.msra.mxu0 0.0
  %114 = vmatprep.subr.mxu0 0.0
  %115 = vmatpush1.msra.mxu0 0.0
  %116 = vmatprep.subr.mxu0 0.0
  %117 = vmatpush1.msra.mxu0 0.0
  %118 = vmatprep.subr.mxu0 0.0
  %119 = vmatpush1.msra.mxu0 0.0
  %120 = vmatprep.subr.mxu0 0.0
  %121 = vmatpush1.msra.mxu0 0.0
  %122 = vmatprep.mubr.f32.mxu0 0.0
  %123 = vmatmul.mubr.f32.gmra.mrb[0].mxu0 %v37
  %v124 = vpop.f32.mrb[0].mxu0
  %v125 = vadd.f32 %v34, %v124
  %v126 = vpop.f32.mrb[0].mxu0
  %127 = vmatprep.mubr.f32.mxu0 0.0
  %128 = vmatmul.mubr.f32.gmra.mrb[0].mxu0 %v40
  %v129 = vpop.f32.mrb[0].mxu0
  %v130 = vadd.f32 %v34, %v129
  %v131 = vpop.f32.mrb[0].mxu0
  %132 = vmatprep.mubr.f32.mxu0 0.0
  %133 = vmatmul.mubr.f32.gmra.mrb[0].mxu0 %v43
  %v134 = vpop.f32.mrb[0].mxu0
  %v135 = vadd.f32 %v34, %v134
  %v136 = vpop.f32.mrb[0].mxu0
  %137 = vmatprep.mubr.f32.mxu0 0.0
  %138 = vmatmul.mubr.f32.gmra.mrb[0].mxu0 %v46
  %v139 = vpop.f32.mrb[0].mxu0
  %v140 = vadd.f32 %v34, %v139
  %v141 = vpop.f32.mrb[0].mxu0
  %142 = vmatprep.mubr.f32.mxu0 0.0
  %143 = vmatmul.mubr.f32.gmra.mrb[0].mxu0 %v49
  %v144 = vpop.f32.mrb[0].mxu0
  %v145 = vadd.f32 %v34, %v144
  %v146 = vpop.f32.mrb[0].mxu0
  %147 = vmatprep.mubr.f32.mxu0 0.0
  %148 = vmatmul.mubr.f32.gmra.mrb[0].mxu0 %v52
  %v149 = vpop.f32.mrb[0].mxu0
  %v150 = vadd.f32 %v34, %v149
  %v151 = vpop.f32.mrb[0].mxu0
  %152 = vdwg.mxu0
  %v153 = vmax.f32 %v125, 0.0
  %v154 = vmax.f32 %v130, 0.0
  %v155 = vmax.f32 %v135, 0.0
  %v156 = vmax.f32 %v140, 0.0
  %v157 = vmax.f32 %v145, 0.0
  %v158 = vmax.f32 %v150, 0.0
  %v159 = vld [vmem:[%s2] sm:$0xff]
  %v160 = vld [vmem:[%s2 + $0x8] sm:$0xf]
  %v161 = vlaneseq
  %v162 = vshrl.u32 %v161, 7
  %v163 = vsub.s32 1, %v162
  %v164 = vrot.slane %v23, %v163
  %vm165 = vcmask 97280
  %v167 = vsel %vm165, %v153, 0
  %v170 = vsel %vm165, %v154, 0
  %v173 = vsel %vm165, %v155, 0
  %v176 = vsel %vm165, %v156, 0
  %v179 = vsel %vm165, %v157, 0
  %v182 = vsel %vm165, %v158, 0
  %v185 = vsel %vm54, %v160, 0
  %187 = vmatprep.subr.mxu0 0.0
  %188 = vmatpush1.msra.mxu0 %v159
  %189 = vmatprep.subr.mxu0 0.0
  %190 = vmatpush1.msra.mxu0 %v185
  %191 = vmatprep.subr.mxu0 0.0
  %192 = vmatpush1.msra.mxu0 0.0
  %193 = vmatprep.subr.mxu0 0.0
  %194 = vmatpush1.msra.mxu0 0.0
  %195 = vmatprep.subr.mxu0 0.0
  %196 = vmatpush1.msra.mxu0 0.0
  %197 = vmatprep.subr.mxu0 0.0
  %198 = vmatpush1.msra.mxu0 0.0
  %199 = vmatprep.subr.mxu0 0.0
  %200 = vmatpush1.msra.mxu0 0.0
  %201 = vmatprep.subr.mxu0 0.0
  %202 = vmatpush1.msra.mxu0 0.0
  %203 = vmatprep.subr.mxu0 0.0
  %204 = vmatpush1.msra.mxu0 0.0
  %205 = vmatprep.subr.mxu0 0.0
  %206 = vmatpush1.msra.mxu0 0.0
  %207 = vmatprep.subr.mxu0 0.0
  %208 = vmatpush1.msra.mxu0 0.0
  %209 = vmatprep.subr.mxu0 0.0
  %210 = vmatpush1.msra.mxu0 0.0
  %211 = vmatprep.subr.mxu0 0.0
  %212 = vmatpush1.msra.mxu0 0.0
  %213 = vmatprep.subr.mxu0 0.0
  %214 = vmatpush1.msra.mxu0 0.0
  %215 = vmatprep.subr.mxu0 0.0
  %216 = vmatpush1.msra.mxu0 0.0
  %217 = vmatprep.subr.mxu0 0.0
  %218 = vmatpush1.msra.mxu0 0.0
  %219 = vmatprep.subr.mxu0 0.0
  %220 = vmatpush1.msra.mxu0 0.0
  %221 = vmatprep.subr.mxu0 0.0
  %222 = vmatpush1.msra.mxu0 0.0
  %223 = vmatprep.subr.mxu0 0.0
  %224 = vmatpush1.msra.mxu0 0.0
  %225 = vmatprep.subr.mxu0 0.0
  %226 = vmatpush1.msra.mxu0 0.0
  %227 = vmatprep.subr.mxu0 0.0
  %228 = vmatpush1.msra.mxu0 0.0
  %229 = vmatprep.subr.mxu0 0.0
  %230 = vmatpush1.msra.mxu0 0.0
  %231 = vmatprep.subr.mxu0 0.0
  %232 = vmatpush1.msra.mxu0 0.0
  %233 = vmatprep.subr.mxu0 0.0
  %234 = vmatpush1.msra.mxu0 0.0
  %235 = vmatprep.subr.mxu0 0.0
  %236 = vmatpush1.msra.mxu0 0.0
  %237 = vmatprep.subr.mxu0 0.0
  %238 = vmatpush1.msra.mxu0 0.0
  %239 = vmatprep.subr.mxu0 0.0
  %240 = vmatpush1.msra.mxu0 0.0
  %241 = vmatprep.subr.mxu0 0.0
  %242 = vmatpush1.msra.mxu0 0.0
  %243 = vmatprep.subr.mxu0 0.0
  %244 = vmatpush1.msra.mxu0 0.0
  %245 = vmatprep.subr.mxu0 0.0
  %246 = vmatpush1.msra.mxu0 0.0
  %247 = vmatprep.subr.mxu0 0.0
  %248 = vmatpush1.msra.mxu0 0.0
  %249 = vmatprep.subr.mxu0 0.0
  %250 = vmatpush1.msra.mxu0 0.0
  %251 = vmatprep.mubr.f32.mxu0 0.0
  %252 = vmatmul.mubr.f32.gmra.mrb[0].mxu0 %v167
  %v253 = vpop.f32.mrb[0].mxu0
  %v254 = vadd.f32 %v164, %v253
  %v255 = vpop.f32.mrb[0].mxu0
  %256 = vmatprep.mubr.f32.mxu0 0.0
  %257 = vmatmul.mubr.f32.gmra.mrb[0].mxu0 %v170
  %v258 = vpop.f32.mrb[0].mxu0
  %v259 = vadd.f32 %v164, %v258
  %v260 = vpop.f32.mrb[0].mxu0
  %261 = vmatprep.mubr.f32.mxu0 0.0
  %262 = vmatmul.mubr.f32.gmra.mrb[0].mxu0 %v173
  %v263 = vpop.f32.mrb[0].mxu0
  %v264 = vadd.f32 %v164, %v263
  %v265 = vpop.f32.mrb[0].mxu0
  %266 = vmatprep.mubr.f32.mxu0 0.0
  %267 = vmatmul.mubr.f32.gmra.mrb[0].mxu0 %v176
  %v268 = vpop.f32.mrb[0].mxu0
  %v269 = vadd.f32 %v164, %v268
  %v270 = vpop.f32.mrb[0].mxu0
  %271 = vmatprep.mubr.f32.mxu0 0.0
  %272 = vmatmul.mubr.f32.gmra.mrb[0].mxu0 %v179
  %v273 = vpop.f32.mrb[0].mxu0
  %v274 = vadd.f32 %v164, %v273
  %v275 = vpop.f32.mrb[0].mxu0
  %276 = vmatprep.mubr.f32.mxu0 0.0
  %277 = vmatmul.mubr.f32.gmra.mrb[0].mxu0 %v182
  %v278 = vpop.f32.mrb[0].mxu0
  %v279 = vadd.f32 %v164, %v278
  %v280 = vpop.f32.mrb[0].mxu0
  %281 = vdwg.mxu0
  %v282 = vld [vmem:[%s3] sm:$0xff]
  %283 = vxpose.xlu0.b32.start [1/16] %v254, 128
  %284 = vxpose.xlu0.b32.cont [2/16] 0.0, 128
  %285 = vxpose.xlu0.b32.cont [3/16] 0.0, 128
  %286 = vxpose.xlu0.b32.cont [4/16] 0.0, 128
  %287 = vxpose.xlu0.b32.cont [5/16] 0.0, 128
  %288 = vxpose.xlu0.b32.cont [6/16] 0.0, 128
  %289 = vxpose.xlu0.b32.cont [7/16] 0.0, 128
  %290 = vxpose.xlu0.b32.cont [8/16] 0.0, 128
  %291 = vxpose.xlu0.b32.cont [9/16] 0.0, 128
  %292 = vxpose.xlu0.b32.cont [10/16] 0.0, 128
  %293 = vxpose.xlu0.b32.cont [11/16] 0.0, 128
  %294 = vxpose.xlu0.b32.cont [12/16] 0.0, 128
  %295 = vxpose.xlu0.b32.cont [13/16] 0.0, 128
  %296 = vxpose.xlu0.b32.cont [14/16] 0.0, 128
  %297 = vxpose.xlu0.b32.cont [15/16] 0.0, 128
  %298 = vxpose.xlu0.b32.end [16/16] 0.0, 128
  %v299 = vpop.trf.xlu0
  %v300 = vpop.trf.xlu0
  %v301 = vpop.trf.xlu0
  %v302 = vpop.trf.xlu0
  %v303 = vpop.trf.xlu0
  %v304 = vpop.trf.xlu0
  %v305 = vpop.trf.xlu0
  %v306 = vpop.trf.xlu0
  %v307 = vpop.trf.xlu0
  %v308 = vpop.trf.xlu0
  %v309 = vpop.trf.xlu0
  %v310 = vpop.trf.xlu0
  %v311 = vpop.trf.xlu0
  %v312 = vpop.trf.xlu0
  %v313 = vpop.trf.xlu0
  %v314 = vpop.trf.xlu0
  %315 = vxpose.xlu0.b32.start [1/16] %v259, 128
  %316 = vxpose.xlu0.b32.cont [2/16] 0.0, 128
  %317 = vxpose.xlu0.b32.cont [3/16] 0.0, 128
  %318 = vxpose.xlu0.b32.cont [4/16] 0.0, 128
  %319 = vxpose.xlu0.b32.cont [5/16] 0.0, 128
  %320 = vxpose.xlu0.b32.cont [6/16] 0.0, 128
  %321 = vxpose.xlu0.b32.cont [7/16] 0.0, 128
  %322 = vxpose.xlu0.b32.cont [8/16] 0.0, 128
  %323 = vxpose.xlu0.b32.cont [9/16] 0.0, 128
  %324 = vxpose.xlu0.b32.cont [10/16] 0.0, 128
  %325 = vxpose.xlu0.b32.cont [11/16] 0.0, 128
  %326 = vxpose.xlu0.b32.cont [12/16] 0.0, 128
  %327 = vxpose.xlu0.b32.cont [13/16] 0.0, 128
  %328 = vxpose.xlu0.b32.cont [14/16] 0.0, 128
  %329 = vxpose.xlu0.b32.cont [15/16] 0.0, 128
  %330 = vxpose.xlu0.b32.end [16/16] 0.0, 128
  %v331 = vpop.trf.xlu0
  %v332 = vpop.trf.xlu0
  %v333 = vpop.trf.xlu0
  %v334 = vpop.trf.xlu0
  %v335 = vpop.trf.xlu0
  %v336 = vpop.trf.xlu0
  %v337 = vpop.trf.xlu0
  %v338 = vpop.trf.xlu0
  %v339 = vpop.trf.xlu0
  %v340 = vpop.trf.xlu0
  %v341 = vpop.trf.xlu0
  %v342 = vpop.trf.xlu0
  %v343 = vpop.trf.xlu0
  %v344 = vpop.trf.xlu0
  %v345 = vpop.trf.xlu0
  %v346 = vpop.trf.xlu0
  %v347 = vlaneseq
  %v348 = vshrl.u32 %v347, 7
  %v349 = vsub.s32 2, %v348
  %v350 = vrot.slane %v23, %v349
  %v353 = vcombine.low %v299, %v331
  %vm354 = vcmask 64512
  %v355 = vsel %vm354, %v353, 0
  %357 = vmatprep.subr.mxu0 0.0
  %358 = vmatpush1.msra.mxu0 %v282
  %359 = vmatprep.subr.mxu0 0.0
  %360 = vmatpush1.msra.mxu0 0.0
  %361 = vmatprep.subr.mxu0 0.0
  %362 = vmatpush1.msra.mxu0 0.0
  %363 = vmatprep.subr.mxu0 0.0
  %364 = vmatpush1.msra.mxu0 0.0
  %365 = vmatprep.subr.mxu0 0.0
  %366 = vmatpush1.msra.mxu0 0.0
  %367 = vmatprep.subr.mxu0 0.0
  %368 = vmatpush1.msra.mxu0 0.0
  %369 = vmatprep.subr.mxu0 0.0
  %370 = vmatpush1.msra.mxu0 0.0
  %371 = vmatprep.subr.mxu0 0.0
  %372 = vmatpush1.msra.mxu0 0.0
  %373 = vmatprep.subr.mxu0 0.0
  %374 = vmatpush1.msra.mxu0 0.0
  %375 = vmatprep.subr.mxu0 0.0
  %376 = vmatpush1.msra.mxu0 0.0
  %377 = vmatprep.subr.mxu0 0.0
  %378 = vmatpush1.msra.mxu0 0.0
  %379 = vmatprep.subr.mxu0 0.0
  %380 = vmatpush1.msra.mxu0 0.0
  %381 = vmatprep.subr.mxu0 0.0
  %382 = vmatpush1.msra.mxu0 0.0
  %383 = vmatprep.subr.mxu0 0.0
  %384 = vmatpush1.msra.mxu0 0.0
  %385 = vmatprep.subr.mxu0 0.0
  %386 = vmatpush1.msra.mxu0 0.0
  %387 = vmatprep.subr.mxu0 0.0
  %388 = vmatpush1.msra.mxu0 0.0
  %389 = vmatprep.subr.mxu0 0.0
  %390 = vmatpush1.msra.mxu0 0.0
  %391 = vmatprep.subr.mxu0 0.0
  %392 = vmatpush1.msra.mxu0 0.0
  %393 = vmatprep.subr.mxu0 0.0
  %394 = vmatpush1.msra.mxu0 0.0
  %395 = vmatprep.subr.mxu0 0.0
  %396 = vmatpush1.msra.mxu0 0.0
  %397 = vmatprep.subr.mxu0 0.0
  %398 = vmatpush1.msra.mxu0 0.0
  %399 = vmatprep.subr.mxu0 0.0
  %400 = vmatpush1.msra.mxu0 0.0
  %401 = vmatprep.subr.mxu0 0.0
  %402 = vmatpush1.msra.mxu0 0.0
  %403 = vmatprep.subr.mxu0 0.0
  %404 = vmatpush1.msra.mxu0 0.0
  %405 = vmatprep.subr.mxu0 0.0
  %406 = vmatpush1.msra.mxu0 0.0
  %407 = vmatprep.subr.mxu0 0.0
  %408 = vmatpush1.msra.mxu0 0.0
  %409 = vmatprep.subr.mxu0 0.0
  %410 = vmatpush1.msra.mxu0 0.0
  %411 = vmatprep.subr.mxu0 0.0
  %412 = vmatpush1.msra.mxu0 0.0
  %413 = vmatprep.subr.mxu0 0.0
  %414 = vmatpush1.msra.mxu0 0.0
  %415 = vmatprep.subr.mxu0 0.0
  %416 = vmatpush1.msra.mxu0 0.0
  %417 = vmatprep.subr.mxu0 0.0
  %418 = vmatpush1.msra.mxu0 0.0
  %419 = vmatprep.subr.mxu0 0.0
  %420 = vmatpush1.msra.mxu0 0.0
  %421 = vmatprep.mubr.f32.mxu0 0.0
  %422 = vmatmul.mubr.f32.gmra.mrb[0].mxu0 %v355
  %v423 = vpop.f32.mrb[0].mxu0
  %v424 = vadd.f32 %v350, %v423
  %v425 = vpop.f32.mrb[0].mxu0
  %426 = vdwg.mxu0
  %v427 = vld [vmem:[%s4] sm:$0xff]
  %v428 = vld [vmem:[%s4 + $0x8] sm:$0xff]
  %429 = vxpose.xlu0.b32.start [1/16] %v264, 128
  %430 = vxpose.xlu0.b32.cont [2/16] %v269, 128
  %431 = vxpose.xlu0.b32.cont [3/16] 0.0, 128
  %432 = vxpose.xlu0.b32.cont [4/16] 0.0, 128
  %433 = vxpose.xlu0.b32.cont [5/16] 0.0, 128
  %434 = vxpose.xlu0.b32.cont [6/16] 0.0, 128
  %435 = vxpose.xlu0.b32.cont [7/16] 0.0, 128
  %436 = vxpose.xlu0.b32.cont [8/16] 0.0, 128
  %437 = vxpose.xlu0.b32.cont [9/16] 0.0, 128
  %438 = vxpose.xlu0.b32.cont [10/16] 0.0, 128
  %439 = vxpose.xlu0.b32.cont [11/16] 0.0, 128
  %440 = vxpose.xlu0.b32.cont [12/16] 0.0, 128
  %441 = vxpose.xlu0.b32.cont [13/16] 0.0, 128
  %442 = vxpose.xlu0.b32.cont [14/16] 0.0, 128
  %443 = vxpose.xlu0.b32.cont [15/16] 0.0, 128
  %444 = vxpose.xlu0.b32.end [16/16] 0.0, 128
  %v445 = vpop.trf.xlu0
  %v446 = vpop.trf.xlu0
  %v447 = vpop.trf.xlu0
  %v448 = vpop.trf.xlu0
  %v449 = vpop.trf.xlu0
  %v450 = vpop.trf.xlu0
  %v451 = vpop.trf.xlu0
  %v452 = vpop.trf.xlu0
  %v453 = vpop.trf.xlu0
  %v454 = vpop.trf.xlu0
  %v455 = vpop.trf.xlu0
  %v456 = vpop.trf.xlu0
  %v457 = vpop.trf.xlu0
  %v458 = vpop.trf.xlu0
  %v459 = vpop.trf.xlu0
  %v460 = vpop.trf.xlu0
  %461 = vxpose.xlu0.b32.start [1/16] %v274, 128
  %462 = vxpose.xlu0.b32.cont [2/16] %v279, 128
  %463 = vxpose.xlu0.b32.cont [3/16] 0.0, 128
  %464 = vxpose.xlu0.b32.cont [4/16] 0.0, 128
  %465 = vxpose.xlu0.b32.cont [5/16] 0.0, 128
  %466 = vxpose.xlu0.b32.cont [6/16] 0.0, 128
  %467 = vxpose.xlu0.b32.cont [7/16] 0.0, 128
  %468 = vxpose.xlu0.b32.cont [8/16] 0.0, 128
  %469 = vxpose.xlu0.b32.cont [9/16] 0.0, 128
  %470 = vxpose.xlu0.b32.cont [10/16] 0.0, 128
  %471 = vxpose.xlu0.b32.cont [11/16] 0.0, 128
  %472 = vxpose.xlu0.b32.cont [12/16] 0.0, 128
  %473 = vxpose.xlu0.b32.cont [13/16] 0.0, 128
  %474 = vxpose.xlu0.b32.cont [14/16] 0.0, 128
  %475 = vxpose.xlu0.b32.cont [15/16] 0.0, 128
  %476 = vxpose.xlu0.b32.end [16/16] 0.0, 128
  %v477 = vpop.trf.xlu0
  %v478 = vpop.trf.xlu0
  %v479 = vpop.trf.xlu0
  %v480 = vpop.trf.xlu0
  %v481 = vpop.trf.xlu0
  %v482 = vpop.trf.xlu0
  %v483 = vpop.trf.xlu0
  %v484 = vpop.trf.xlu0
  %v485 = vpop.trf.xlu0
  %v486 = vpop.trf.xlu0
  %v487 = vpop.trf.xlu0
  %v488 = vpop.trf.xlu0
  %v489 = vpop.trf.xlu0
  %v490 = vpop.trf.xlu0
  %v491 = vpop.trf.xlu0
  %v492 = vpop.trf.xlu0
  %v493 = vlaneseq
  %v494 = vshrl.u32 %v493, 7
  %v495 = vsub.s32 3, %v494
  %v496 = vrot.slane %v23, %v495
  %v499 = vcombine.low %v445, %v477
  %vm500 = vcmask 130048
  %v501 = vsel %vm500, %v499, 0
  %503 = vmatprep.subr.mxu0 0.0
  %504 = vmatpush1.msra.mxu0 %v427
  %505 = vmatprep.subr.mxu0 0.0
  %506 = vmatpush1.msra.mxu0 %v428
  %507 = vmatprep.subr.mxu0 0.0
  %508 = vmatpush1.msra.mxu0 0.0
  %509 = vmatprep.subr.mxu0 0.0
  %510 = vmatpush1.msra.mxu0 0.0
  %511 = vmatprep.subr.mxu0 0.0
  %512 = vmatpush1.msra.mxu0 0.0
  %513 = vmatprep.subr.mxu0 0.0
  %514 = vmatpush1.msra.mxu0 0.0
  %515 = vmatprep.subr.mxu0 0.0
  %516 = vmatpush1.msra.mxu0 0.0
  %517 = vmatprep.subr.mxu0 0.0
  %518 = vmatpush1.msra.mxu0 0.0
  %519 = vmatprep.subr.mxu0 0.0
  %520 = vmatpush1.msra.mxu0 0.0
  %521 = vmatprep.subr.mxu0 0.0
  %522 = vmatpush1.msra.mxu0 0.0
  %523 = vmatprep.subr.mxu0 0.0
  %524 = vmatpush1.msra.mxu0 0.0
  %525 = vmatprep.subr.mxu0 0.0
  %526 = vmatpush1.msra.mxu0 0.0
  %527 = vmatprep.subr.mxu0 0.0
  %528 = vmatpush1.msra.mxu0 0.0
  %529 = vmatprep.subr.mxu0 0.0
  %530 = vmatpush1.msra.mxu0 0.0
  %531 = vmatprep.subr.mxu0 0.0
  %532 = vmatpush1.msra.mxu0 0.0
  %533 = vmatprep.subr.mxu0 0.0
  %534 = vmatpush1.msra.mxu0 0.0
  %535 = vmatprep.subr.mxu0 0.0
  %536 = vmatpush1.msra.mxu0 0.0
  %537 = vmatprep.subr.mxu0 0.0
  %538 = vmatpush1.msra.mxu0 0.0
  %539 = vmatprep.subr.mxu0 0.0
  %540 = vmatpush1.msra.mxu0 0.0
  %541 = vmatprep.subr.mxu0 0.0
  %542 = vmatpush1.msra.mxu0 0.0
  %543 = vmatprep.subr.mxu0 0.0
  %544 = vmatpush1.msra.mxu0 0.0
  %545 = vmatprep.subr.mxu0 0.0
  %546 = vmatpush1.msra.mxu0 0.0
  %547 = vmatprep.subr.mxu0 0.0
  %548 = vmatpush1.msra.mxu0 0.0
  %549 = vmatprep.subr.mxu0 0.0
  %550 = vmatpush1.msra.mxu0 0.0
  %551 = vmatprep.subr.mxu0 0.0
  %552 = vmatpush1.msra.mxu0 0.0
  %553 = vmatprep.subr.mxu0 0.0
  %554 = vmatpush1.msra.mxu0 0.0
  %555 = vmatprep.subr.mxu0 0.0
  %556 = vmatpush1.msra.mxu0 0.0
  %557 = vmatprep.subr.mxu0 0.0
  %558 = vmatpush1.msra.mxu0 0.0
  %559 = vmatprep.subr.mxu0 0.0
  %560 = vmatpush1.msra.mxu0 0.0
  %561 = vmatprep.subr.mxu0 0.0
  %562 = vmatpush1.msra.mxu0 0.0
  %563 = vmatprep.subr.mxu0 0.0
  %564 = vmatpush1.msra.mxu0 0.0
  %565 = vmatprep.subr.mxu0 0.0
  %566 = vmatpush1.msra.mxu0 0.0
  %567 = vmatprep.mubr.f32.mxu0 0.0
  %568 = vmatmul.mubr.f32.gmra.mrb[0].mxu0 %v501
  %v569 = vpop.f32.mrb[0].mxu0
  %v570 = vadd.f32 %v496, %v569
  %v571 = vpop.f32.mrb[0].mxu0
  %572 = vdwg.mxu0
  %574 = vrot.lane.b32.xlu0 %v570, 8
  %v575 = vpop.permute.xlu0 %574
  %v577 = vsel %vm354, %v424, %v575
  %vm578 = vcmask 195584
  %579 = vst.msk [vmem:[%s6] sm:$0xff] %vm578, %v577
  // Predicated region
  $region26: #{time_embedding_forward.1} parent=0 // pred_check
    _
  $region27: #{time_embedding_forward.1} parent=0 // pred_check_branch
    %581 = sbr.rel (0) target = $region29
  $region28: #{time_embedding_forward.1} parent=0 // pred_region
    _
  $region29: #{time_embedding_forward.1} parent=0 // pred_fallthru
    _
  // Predicated region
  $region30: #{time_embedding_forward.1} parent=0 // pred_check
    _
  $region31: #{time_embedding_forward.1} parent=0 // pred_check_branch
    %583 = sbr.rel (0) target = $region33
  $region32: #{time_embedding_forward.1} parent=0 // pred_region
    _
  $region33: #{time_embedding_forward.1} parent=0 // pred_fallthru
    _

</llo_original>
